<compile_context>
chip_gen: v6e
topology: v6e:2x2x1
jax: 0.10.0
libtpu: 0.0.40
codegen_flags: <defaults>
</compile_context>

<pallas_src>
import jax
import jax.numpy as jnp
from jax.experimental import pallas as pl
from jax.experimental.pallas import tpu as pltpu

LANE = 128
SUBL = 8
_MIN_TILE = SUBL * LANE                  # 1024 elems = one (8,128) vreg of f32
_SINGLE_BLOCK_BYTES = 4 * 1024 * 1024    # <= 4 MiB: single full-array block, no grid
_GRID_BLOCK_BYTES = 2 * 1024 * 1024      # ~2 MiB/block; 4 double-buffered bufs fit v5e scoped VMEM
_GRID_LANES = 1024                       # wide lane-dense last dim for the gridded path


def _gain_kernel(gain_ref, x_ref, o_ref):
    # gain_ref: SMEM scalar (shape (1,)), x_ref/o_ref: VMEM blocks
    o_ref[...] = x_ref[...] * gain_ref[0]


def apply_gain(tensor_in: jax.Array, gain) -> jax.Array:
    """Elementwise multiply `tensor_in` by scalar `gain` using a Pallas TPU kernel."""
    orig_shape = tensor_in.shape
    dtype = tensor_in.dtype
    itemsize = jnp.dtype(dtype).itemsize

    gain_arr = jnp.asarray(gain, dtype=dtype).reshape(1)

    flat = tensor_in.reshape(-1)
    n = flat.shape[0]

    pad = (-n) % _MIN_TILE
    if pad:
        # TODO(synk): for ragged sizes a masked in-kernel tail store would avoid
        # these extra whole-tensor HBM passes; kept simple since typical NCHW
        # activation sizes (and the demo) are already 1024-aligned.
        flat = jnp.pad(flat, (0, pad))
    padded_n = n + pad
    nbytes = padded_n * itemsize

    if nbytes <= _SINGLE_BLOCK_BYTES:
        # Small input: one full-array, lane-dense block; no grid loop at all.
        x2d = flat.reshape(SUBL, padded_n // SUBL)   # full sublanes, wide multiple-of-128 lanes
        out2d = pl.pallas_call(
            _gain_kernel,
            out_shape=jax.ShapeDtypeStruct(x2d.shape, dtype),
            in_specs=[
                pl.BlockSpec(memory_space=pltpu.SMEM),   # gain scalar
                pl.BlockSpec(memory_space=pltpu.VMEM),   # whole input tile
            ],
            out_specs=pl.BlockSpec(memory_space=pltpu.VMEM),
        )(gain_arr, x2d)
    else:
        # Large input: multi-MiB lane-dense blocks over a parallel 1-D grid
        # (shards across both TensorCores on v7x; near-neutral on v5e/v6e).
        C = _GRID_LANES
        R = padded_n // C                              # padded_n is a multiple of 1024 == C
        BR = max(SUBL, (_GRID_BLOCK_BYTES // (C * itemsize)) // SUBL * SUBL)
        x2d = flat.reshape(R, C)
        out2d = pl.pallas_call(
            _gain_kernel,
            out_shape=jax.ShapeDtypeStruct((R, C), dtype),
            grid=(pl.cdiv(R, BR),),
            in_specs=[
                pl.BlockSpec(memory_space=pltpu.SMEM),       # gain scalar
                pl.BlockSpec((BR, C), lambda i: (i, 0)),     # ~2 MiB input block
            ],
            out_specs=pl.BlockSpec((BR, C), lambda i: (i, 0)),
            compiler_params=pltpu.CompilerParams(
                dimension_semantics=("parallel",),
            ),
        )(gain_arr, x2d)

    out_flat = out2d.reshape(-1)
    if pad:
        out_flat = out_flat[:n]
    return out_flat.reshape(orig_shape)


if __name__ == "__main__":
    key = jax.random.PRNGKey(0)
    k1, k2 = jax.random.split(key)

    # Small NCHW-style input, consistent with a typical conv-module shape.
    x = jax.random.normal(k1, (2, 4, 16, 16), dtype=jnp.float32)
    gain = jax.random.uniform(k2, (), dtype=jnp.float32) * 2.0 + 0.5

    out = apply_gain(x, gain)
    jax.block_until_ready(out)

    # Correctness check against the obvious reference.
    ref = x * gain
    assert out.shape == x.shape and out.dtype == x.dtype
    assert jnp.allclose(out, ref, rtol=1e-6, atol=1e-6)

    print("KERNEL_OK")
</pallas_src>

<mosaic_0001>
module attributes {stable_mosaic.version = 11 : i64} {
  func.func @_gain_kernel(%arg0: memref<1xf32, #tpu.memory_space<smem>>, %arg1: memref<8x256xf32, #tpu.memory_space<vmem>>, %arg2: memref<8x256xf32, #tpu.memory_space<vmem>>) attributes {dimension_semantics = [], scalar_prefetch = 0 : i64, scratch_operands = 0 : i64, tpu.core_type = #tpu.core_type<tc>} {
    %c0 = arith.constant 0 : index
    %c0_0 = arith.constant 0 : index
    %0 = vector.load %arg1[%c0, %c0_0] : memref<8x256xf32, #tpu.memory_space<vmem>>, vector<8x256xf32>
    %c0_1 = arith.constant 0 : index
    %1 = memref.load %arg0[%c0_1] : memref<1xf32, #tpu.memory_space<smem>>
    %2 = vector.broadcast %1 : f32 to vector<8x256xf32>
    %3 = arith.mulf %0, %2 : vector<8x256xf32>
    %c0_2 = arith.constant 0 : index
    %c0_3 = arith.constant 0 : index
    %4 = vector.load %arg2[%c0_2, %c0_3] : memref<8x256xf32, #tpu.memory_space<vmem>>, vector<8x256xf32>
    tpu.vector_store %arg2[%c0_2, %c0_3], %3 {strides = array<i32>} : memref<8x256xf32, #tpu.memory_space<vmem>>, vector<8x256xf32>,
    return
  }
}

</mosaic_0001>

<llo_original>
// kernel: tpu_custom_call.1
$region0: #{tpu_custom_call.1}
  #allocation0 [shape = 'u32[]', space=smem, size = 0x4, offset = 0x4, fixed_abs, tag = 'smem constant byte address 0x4 - core index']
  #allocation1 [shape = 'u32[144,128]{1,0:T(1,128)}', space=vmem, size = 0x12000, scoped, tag = 'internal scratch']
  #allocation2 [shape = 'f32[1]{0:T(128)S(6)}', space=smem, size = 0x200, scoped, tag = 'scoped memory for tpu_custom_call.1']
  %s0 = inlined_call_operand.<no memory space> [shape: f32[1], index: 0, kind: input, shape index: {}]
  %s1 = inlined_call_operand.hbm [shape: f32[8,256], index: 1, kind: input, shape index: {}]
  %s2 = inlined_call_operand.hbm [shape: f32[8,256], index: 2, kind: output, shape index: {}]
  %s3 = sld [smem:[#allocation0]]
  $region22: #{tpu_custom_call.1} parent=0
    _
  %s5 = ssub.s32 1, %s3
  %s6 = scalar_select 0, %s5, %s3
  %7 = sst [smem:[#allocation2]] %s0
  $region1: #{tpu_custom_call.1} parent=0
    #allocation3 [shape = 'u8[8192]{0}', space=vmem, size = 0x2000, scoped, tag = 'input window, operand 1, single buffered']
    #allocation4 [shape = 's32[1]{0}', space=sflag, size = 0x4, scoped, tag = 'scoped memory for tpu_custom_call.1']
    #allocation5 [shape = 's32[1]{0}', space=sflag, size = 0x4, scoped, tag = 'scoped memory for tpu_custom_call.1']
    #allocation6 [shape = 'u8[8192]{0}', space=vmem, size = 0x2000, scoped, tag = 'output window, operand 0, single buffered']
    %8 = vsyncpa [#allocation4], 0
    %9 = vsyncpa [#allocation5], 0
    // Predicated region
    $region2: #{tpu_custom_call.1} parent=1 // pred_check
      _
    $region3: #{tpu_custom_call.1} parent=1 // pred_check_branch
      %11 = sbr.rel (0) target = $region5
    $region4: #{tpu_custom_call.1} parent=1 // pred_region
      _
    $region5: #{tpu_custom_call.1} parent=1 // pred_fallthru
      _
    // Predicated region
    $region6: #{tpu_custom_call.1} parent=1 // pred_check
      _
    $region7: #{tpu_custom_call.1} parent=1 // pred_check_branch
      %13 = sbr.rel (0) target = $region9
    $region8: #{tpu_custom_call.1} parent=1 // pred_region
      %s15 = ssub.s32 256, 256
      %16 = vsyncadd [#allocation4], %s15
      %s18 = sshll.u32 [#allocation3], 4
      %s19 = int_to_ptr.vmem [resolvable:$true] %s18
      %21 = dma.hbm_to_vmem [thread:$0]  %s1, 256, %s19, [#allocation4]
    $region9: #{tpu_custom_call.1} parent=1 // pred_fallthru
      _
    // Predicated region
    $region10: #{tpu_custom_call.1} parent=1 // pred_check
      _
    $region11: #{tpu_custom_call.1} parent=1 // pred_check_branch
      %23 = sbr.rel (0) target = $region13
    $region12: #{tpu_custom_call.1} parent=1 // pred_region
      %24 = dma.done [#allocation4], 256
    $region13: #{tpu_custom_call.1} parent=1 // pred_fallthru
      _
    %v25 = vld [vmem:[#allocation3] sm:$0xff]
    %v26 = vld [vmem:[#allocation3 + $0x8] sm:$0xff]
    %s27 = sld [smem:[#allocation2]]
    %v28 = vstv %s27
    %v29 = vmul.f32 %v25, %v28
    %v30 = vmul.f32 %v26, %v28
    %31 = vst [vmem:[#allocation6] sm:$0xff] %v29
    %32 = vst [vmem:[#allocation6 + $0x8] sm:$0xff] %v30
    // Predicated region
    $region14: #{tpu_custom_call.1} parent=1 // pred_check
      _
    $region15: #{tpu_custom_call.1} parent=1 // pred_check_branch
      %34 = sbr.rel (0) target = $region17
    $region16: #{tpu_custom_call.1} parent=1 // pred_region
      %s36 = ssub.s32 256, 256
      %37 = vsyncadd [#allocation5], %s36
      %s39 = sshll.u32 [#allocation6], 4
      %s40 = int_to_ptr.vmem [resolvable:$true] %s39
      %42 = dma.vmem_to_hbm [thread:$0]  %s40, 256, %s2, [#allocation5]
    $region17: #{tpu_custom_call.1} parent=1 // pred_fallthru
      _
    // Predicated region
    $region18: #{tpu_custom_call.1} parent=1 // pred_check
      _
    $region19: #{tpu_custom_call.1} parent=1 // pred_check_branch
      %44 = sbr.rel (0) target = $region21
    $region20: #{tpu_custom_call.1} parent=1 // pred_region
      %45 = dma.done [#allocation5], 256
    $region21: #{tpu_custom_call.1} parent=1 // pred_fallthru
      _
    %46 = vsyncpa [#allocation4], 1
    %47 = vsyncpa [#allocation5], 1

</llo_original>
